<compile_context>
chip_gen: v6e
topology: v6e:2x2x1
jax: 0.10.0
libtpu: 0.0.40
codegen_flags: <defaults>
</compile_context>

<pallas_src>
import functools

import jax
import jax.numpy as jnp
from jax.experimental import pallas as pl
from jax.experimental.pallas import tpu as pltpu

_BN_EPS = 1e-5


def _round_up(x, m):
    return (x + m - 1) // m * m


# ------------------------------ Pallas kernels ------------------------------ #

def _se_pool_excite_kernel(x_ref, w1_ref, s1_ref, b1_ref, w2_ref, s2_ref, b2_ref,
                           gate_ref, acc_ref, *, inv_m):
    """Global average pool (tiled over M) + SE excitation branch.

    x_ref   : (1, TM, C)    activation tile (zero-padded rows are harmless)
    w1_ref  : (C, Cmid)     conv1 (1x1) weight
    s1,b1   : (1, Cmid)     folded BN1 scale / shift
    w2_ref  : (Cmid, C)     conv2 (1x1) weight
    s2,b2   : (1, C)        folded BN2 scale / shift
    gate_ref: (1, 1, C)     per-(batch, channel) gate, written at last M tile
    acc_ref : (1, C) f32    scratch accumulator (persists across the M axis)
    """
    m = pl.program_id(1)

    @pl.when(m == 0)
    def _():
        acc_ref[...] = jnp.zeros_like(acc_ref)

    acc_ref[...] += jnp.sum(x_ref[0].astype(jnp.float32), axis=0, keepdims=True)

    @pl.when(m == pl.num_programs(1) - 1)
    def _():
        mean = acc_ref[...] * inv_m                                   # (1, C)
        h = jnp.dot(mean, w1_ref[...], preferred_element_type=jnp.float32)
        h = jnp.maximum(h * s1_ref[...] + b1_ref[...], 0.0)           # BN1+ReLU
        g = jnp.dot(h, w2_ref[...], preferred_element_type=jnp.float32)
        g = g * s2_ref[...] + b2_ref[...]                             # BN2
        g = jnp.clip(g * (1.0 / 6.0) + 0.5, 0.0, 1.0)                 # hardsigmoid
        gate_ref[0] = g.astype(gate_ref.dtype)


def _se_scale_kernel(x_ref, gate_ref, o_ref):
    """out = x * gate, broadcast over the M (spatial) tile.

    x_ref: (1, TM, C), gate_ref: (1, 1, C), o_ref: (1, TM, C)
    """
    o_ref[0] = (x_ref[0].astype(jnp.float32) * gate_ref[0]).astype(o_ref.dtype)


# ------------------------------ wrapper ------------------------------ #

def se_module_forward(x_nchw, params, *, max_tile_bytes=1 << 20):
    """Matches SEModule.forward (eval-mode BN).  x_nchw: (N, C, H, W)."""
    N, C, H, W = x_nchw.shape
    M = H * W
    Cmid = params["w1"].shape[1]

    # NCHW -> (N, M, C) channels-last flat.
    x = jnp.transpose(x_nchw, (0, 2, 3, 1)).reshape(N, M, C).astype(jnp.float32)

    # M tile: multiple of 8 sublanes, ~1 MiB per (TM, C) f32 tile so
    # double-buffered inputs + outputs fit every generation's scoped VMEM.
    tm = max(8, min(512, (max_tile_bytes // (C * 4)) // 8 * 8))
    tm = min(tm, _round_up(M, 8))
    m_pad = _round_up(M, tm)
    if m_pad != M:
        x = jnp.pad(x, ((0, 0), (0, m_pad - M), (0, 0)))  # zero rows: sum-safe
    grid = (N, m_pad // tm)

    # ---- Kernel A: global avg pool + excitation (gate per (n, c)) ---- #
    gate = pl.pallas_call(
        functools.partial(_se_pool_excite_kernel, inv_m=1.0 / float(M)),
        out_shape=jax.ShapeDtypeStruct((N, 1, C), jnp.float32),
        grid=grid,
        in_specs=[
            pl.BlockSpec((1, tm, C), lambda n, m: (n, m, 0)),
            pl.BlockSpec((C, Cmid), lambda n, m: (0, 0)),   # resident
            pl.BlockSpec((1, Cmid), lambda n, m: (0, 0)),   # resident
            pl.BlockSpec((1, Cmid), lambda n, m: (0, 0)),   # resident
            pl.BlockSpec((Cmid, C), lambda n, m: (0, 0)),   # resident
            pl.BlockSpec((1, C), lambda n, m: (0, 0)),      # resident
            pl.BlockSpec((1, C), lambda n, m: (0, 0)),      # resident
        ],
        out_specs=pl.BlockSpec((1, 1, C), lambda n, m: (n, 0, 0)),
        scratch_shapes=[pltpu.VMEM((1, C), jnp.float32)],
        compiler_params=pltpu.CompilerParams(
            dimension_semantics=("parallel", "arbitrary")),
    )(x, params["w1"], params["s1"], params["b1"],
      params["w2"], params["s2"], params["b2"])

    # ---- Kernel B: broadcast channel-wise scale over all spatial tiles ---- #
    y = pl.pallas_call(
        _se_scale_kernel,
        out_shape=jax.ShapeDtypeStruct((N, m_pad, C), jnp.float32),
        grid=grid,
        in_specs=[
            pl.BlockSpec((1, tm, C), lambda n, m: (n, m, 0)),
            pl.BlockSpec((1, 1, C), lambda n, m: (n, 0, 0)),  # gate resident per n
        ],
        out_specs=pl.BlockSpec((1, tm, C), lambda n, m: (n, m, 0)),
        compiler_params=pltpu.CompilerParams(
            dimension_semantics=("parallel", "parallel")),
    )(x, gate)

    y = y[:, :M, :].reshape(N, H, W, C)
    return jnp.transpose(y, (0, 3, 1, 2))  # back to NCHW


# ------------------------------ parameters ------------------------------ #

def init_se_params(key, in_channels, r=4):
    cmid = in_channels // r
    k1, k2 = jax.random.split(key)
    w1 = jax.random.normal(k1, (in_channels, cmid), jnp.float32) / jnp.sqrt(float(in_channels))
    w2 = jax.random.normal(k2, (cmid, in_channels), jnp.float32) / jnp.sqrt(float(cmid))
    # eval-mode BatchNorm2d folded with default stats (gamma=1, beta=0, mean=0, var=1).
    s1 = jnp.full((1, cmid), 1.0 / jnp.sqrt(1.0 + _BN_EPS), jnp.float32)
    b1 = jnp.zeros((1, cmid), jnp.float32)
    s2 = jnp.full((1, in_channels), 1.0 / jnp.sqrt(1.0 + _BN_EPS), jnp.float32)
    b2 = jnp.zeros((1, in_channels), jnp.float32)
    return dict(w1=w1, s1=s1, b1=b1, w2=w2, s2=s2, b2=b2)


# ------------------------------ pure-JAX reference ------------------------------ #

def se_reference(x_nchw, params):
    xf = x_nchw.astype(jnp.float32)
    pooled = jnp.mean(xf, axis=(2, 3))                       # (N, C)  AdaptiveAvgPool2d(1)
    h = pooled @ params["w1"]                                # conv1 (1x1, no bias)
    h = jnp.maximum(h * params["s1"] + params["b1"], 0.0)    # bn1 + relu
    g = h @ params["w2"]                                     # conv2 (1x1, no bias)
    g = g * params["s2"] + params["b2"]                      # bn2
    g = jnp.clip(g / 6.0 + 0.5, 0.0, 1.0)                    # hardsigmoid
    return xf * g[:, :, None, None]                          # x * out


if __name__ == "__main__":
    key = jax.random.PRNGKey(0)
    pkey, xkey = jax.random.split(key)

    batch, in_channels, spatial, r = 2, 64, 16, 4
    params = init_se_params(pkey, in_channels, r=r)
    x = jax.random.normal(xkey, (batch, in_channels, spatial, spatial), jnp.float32)

    out = jax.block_until_ready(se_module_forward(x, params))
    ref = jax.block_until_ready(se_reference(x, params))

    assert out.shape == (batch, in_channels, spatial, spatial), out.shape
    assert bool(jnp.all(jnp.isfinite(out)))
    err = float(jnp.max(jnp.abs(out - ref)))
    assert bool(jnp.allclose(out, ref, atol=1e-5, rtol=1e-5)), err
    print("KERNEL_OK")
</pallas_src>

<mosaic_0001>
module attributes {stable_mosaic.version = 11 : i64} {
  func.func @_se_pool_excite_kernel(%arg0: i32, %arg1: i32, %arg2: memref<1x256x64xf32, #tpu.memory_space<vmem>>, %arg3: memref<64x16xf32, #tpu.memory_space<vmem>>, %arg4: memref<1x16xf32, #tpu.memory_space<vmem>>, %arg5: memref<1x16xf32, #tpu.memory_space<vmem>>, %arg6: memref<16x64xf32, #tpu.memory_space<vmem>>, %arg7: memref<1x64xf32, #tpu.memory_space<vmem>>, %arg8: memref<1x64xf32, #tpu.memory_space<vmem>>, %arg9: memref<1x1x64xf32, #tpu.memory_space<vmem>>, %arg10: memref<1x64xf32, #tpu.memory_space<vmem>>) attributes {dimension_semantics = [#tpu.dimension_semantics<parallel>, #tpu.dimension_semantics<arbitrary>], iteration_bounds = array<i64: 2, 1>, scalar_prefetch = 0 : i64, scratch_operands = 1 : i64, tpu.core_type = #tpu.core_type<tc>, window_params = [{transform_indices = @transform_0, window_bounds = array<i64: 1, 256, 64>}, {pipeline_mode = #tpu.pipeline_mode<synchronous>, transform_indices = @transform_1, window_bounds = array<i64: 64, 16>}, {pipeline_mode = #tpu.pipeline_mode<synchronous>, transform_indices = @transform_2, window_bounds = array<i64: 1, 16>}, {pipeline_mode = #tpu.pipeline_mode<synchronous>, transform_indices = @transform_3, window_bounds = array<i64: 1, 16>}, {pipeline_mode = #tpu.pipeline_mode<synchronous>, transform_indices = @transform_4, window_bounds = array<i64: 16, 64>}, {pipeline_mode = #tpu.pipeline_mode<synchronous>, transform_indices = @transform_5, window_bounds = array<i64: 1, 64>}, {pipeline_mode = #tpu.pipeline_mode<synchronous>, transform_indices = @transform_6, window_bounds = array<i64: 1, 64>}, {transform_indices = @transform_7, window_bounds = array<i64: 1, 1, 64>}]} {
    %c0_i32 = arith.constant 0 : i32
    %0 = arith.cmpi eq, %arg1, %c0_i32 : i32
    %1 = arith.extui %0 : i1 to i32
    %c0_i32_0 = arith.constant 0 : i32
    %2 = arith.cmpi ne, %1, %c0_i32_0 : i32
    scf.if %2 {
      %cst_9 = arith.constant 0.000000e+00 : f32
      %13 = vector.broadcast %cst_9 : f32 to vector<1x64xf32>
      %c0_10 = arith.constant 0 : index
      %c0_11 = arith.constant 0 : index
      %14 = vector.load %arg10[%c0_10, %c0_11] : memref<1x64xf32, #tpu.memory_space<vmem>>, vector<1x64xf32>
      tpu.vector_store %arg10[%c0_10, %c0_11], %13 {strides = array<i32>} : memref<1x64xf32, #tpu.memory_space<vmem>>, vector<1x64xf32>,
    } else {
    }
    %c0 = arith.constant 0 : index
    %c0_1 = arith.constant 0 : index
    %3 = vector.load %arg10[%c0, %c0_1] : memref<1x64xf32, #tpu.memory_space<vmem>>, vector<1x64xf32>
    %c0_2 = arith.constant 0 : index
    %c0_3 = arith.constant 0 : index
    %c0_4 = arith.constant 0 : index
    %4 = vector.load %arg2[%c0_2, %c0_3, %c0_4] : memref<1x256x64xf32, #tpu.memory_space<vmem>>, vector<1x256x64xf32>
    %5 = vector.shape_cast %4 : vector<1x256x64xf32> to vector<256x64xf32>
    %cst = arith.constant dense<0.000000e+00> : vector<64xf32>
    %6 = vector.multi_reduction <add>, %5, %cst [0] : vector<256x64xf32> to vector<64xf32>
    %7 = vector.shape_cast %6 : vector<64xf32> to vector<1x64xf32>
    %8 = arith.addf %3, %7 : vector<1x64xf32>
    %c0_5 = arith.constant 0 : index
    %c0_6 = arith.constant 0 : index
    %9 = vector.load %arg10[%c0_5, %c0_6] : memref<1x64xf32, #tpu.memory_space<vmem>>, vector<1x64xf32>
    tpu.vector_store %arg10[%c0_5, %c0_6], %8 {strides = array<i32>} : memref<1x64xf32, #tpu.memory_space<vmem>>, vector<1x64xf32>,
    %c0_i32_7 = arith.constant 0 : i32
    %10 = arith.cmpi eq, %arg1, %c0_i32_7 : i32
    %11 = arith.extui %10 : i1 to i32
    %c0_i32_8 = arith.constant 0 : i32
    %12 = arith.cmpi ne, %11, %c0_i32_8 : i32
    scf.if %12 {
      %c0_9 = arith.constant 0 : index
      %c0_10 = arith.constant 0 : index
      %13 = vector.load %arg10[%c0_9, %c0_10] : memref<1x64xf32, #tpu.memory_space<vmem>>, vector<1x64xf32>
      %cst_11 = arith.constant 3.906250e-03 : f32
      %14 = vector.broadcast %cst_11 : f32 to vector<1x64xf32>
      %15 = arith.mulf %13, %14 : vector<1x64xf32>
      %c0_12 = arith.constant 0 : index
      %c0_13 = arith.constant 0 : index
      %16 = vector.load %arg3[%c0_12, %c0_13] : memref<64x16xf32, #tpu.memory_space<vmem>>, vector<64x16xf32>
      %cst_14 = arith.constant dense<0.000000e+00> : vector<1x16xf32>
      %17 = tpu.matmul %15, %16, %cst_14 {dimension_numbers = #tpu.dot_dimension_numbers<[1], [0], [0], [1], [0, 0, 1, 1], [], []>} : vector<1x64xf32>, vector<64x16xf32>, vector<1x16xf32> -> vector<1x16xf32>
      %c0_15 = arith.constant 0 : index
      %c0_16 = arith.constant 0 : index
      %18 = vector.load %arg4[%c0_15, %c0_16] : memref<1x16xf32, #tpu.memory_space<vmem>>, vector<1x16xf32>
      %19 = arith.mulf %17, %18 : vector<1x16xf32>
      %c0_17 = arith.constant 0 : index
      %c0_18 = arith.constant 0 : index
      %20 = vector.load %arg5[%c0_17, %c0_18] : memref<1x16xf32, #tpu.memory_space<vmem>>, vector<1x16xf32>
      %21 = arith.addf %19, %20 : vector<1x16xf32>
      %cst_19 = arith.constant 0.000000e+00 : f32
      %22 = vector.broadcast %cst_19 : f32 to vector<1x16xf32>
      %23 = arith.maximumf %21, %22 : vector<1x16xf32>
      %c0_20 = arith.constant 0 : index
      %c0_21 = arith.constant 0 : index
      %24 = vector.load %arg6[%c0_20, %c0_21] : memref<16x64xf32, #tpu.memory_space<vmem>>, vector<16x64xf32>
      %cst_22 = arith.constant dense<0.000000e+00> : vector<1x64xf32>
      %25 = tpu.matmul %23, %24, %cst_22 {dimension_numbers = #tpu.dot_dimension_numbers<[1], [0], [0], [1], [0, 0, 1, 1], [], []>} : vector<1x16xf32>, vector<16x64xf32>, vector<1x64xf32> -> vector<1x64xf32>
      %c0_23 = arith.constant 0 : index
      %c0_24 = arith.constant 0 : index
      %26 = vector.load %arg7[%c0_23, %c0_24] : memref<1x64xf32, #tpu.memory_space<vmem>>, vector<1x64xf32>
      %27 = arith.mulf %25, %26 : vector<1x64xf32>
      %c0_25 = arith.constant 0 : index
      %c0_26 = arith.constant 0 : index
      %28 = vector.load %arg8[%c0_25, %c0_26] : memref<1x64xf32, #tpu.memory_space<vmem>>, vector<1x64xf32>
      %29 = arith.addf %27, %28 : vector<1x64xf32>
      %cst_27 = arith.constant 0.166666672 : f32
      %30 = vector.broadcast %cst_27 : f32 to vector<1x64xf32>
      %31 = arith.mulf %29, %30 : vector<1x64xf32>
      %cst_28 = arith.constant 5.000000e-01 : f32
      %32 = vector.broadcast %cst_28 : f32 to vector<1x64xf32>
      %33 = arith.addf %31, %32 : vector<1x64xf32>
      %cst_29 = arith.constant 0.000000e+00 : f32
      %cst_30 = arith.constant 1.000000e+00 : f32
      %34 = vector.broadcast %cst_29 : f32 to vector<1x64xf32>
      %35 = arith.maximumf %34, %33 : vector<1x64xf32>
      %36 = vector.broadcast %cst_30 : f32 to vector<1x64xf32>
      %37 = arith.minimumf %36, %35 : vector<1x64xf32>
      %c0_31 = arith.constant 0 : index
      %c0_32 = arith.constant 0 : index
      %c0_33 = arith.constant 0 : index
      %38 = vector.load %arg9[%c0_31, %c0_32, %c0_33] : memref<1x1x64xf32, #tpu.memory_space<vmem>>, vector<1x1x64xf32>
      %39 = vector.shape_cast %38 : vector<1x1x64xf32> to vector<1x64xf32>
      %40 = vector.shape_cast %37 : vector<1x64xf32> to vector<1x1x64xf32>
      tpu.vector_store %arg9[%c0_31, %c0_32, %c0_33], %40 {strides = array<i32>} : memref<1x1x64xf32, #tpu.memory_space<vmem>>, vector<1x1x64xf32>,
    } else {
    }
    return
  }
  func.func @transform_0(%arg0: i32, %arg1: i32) -> (i32, i32, i32) {
    %c0_i32 = arith.constant 0 : i32
    %c0_i32_0 = arith.constant 0 : i32
    return %arg0, %arg1, %c0_i32 : i32, i32, i32
  }
  func.func @transform_1(%arg0: i32, %arg1: i32) -> (i32, i32) {
    %c0_i32 = arith.constant 0 : i32
    %c0_i32_0 = arith.constant 0 : i32
    %c0_i32_1 = arith.constant 0 : i32
    return %c0_i32, %c0_i32_0 : i32, i32
  }
  func.func @transform_2(%arg0: i32, %arg1: i32) -> (i32, i32) {
    %c0_i32 = arith.constant 0 : i32
    %c0_i32_0 = arith.constant 0 : i32
    %c0_i32_1 = arith.constant 0 : i32
    return %c0_i32, %c0_i32_0 : i32, i32
  }
  func.func @transform_3(%arg0: i32, %arg1: i32) -> (i32, i32) {
    %c0_i32 = arith.constant 0 : i32
    %c0_i32_0 = arith.constant 0 : i32
    %c0_i32_1 = arith.constant 0 : i32
    return %c0_i32, %c0_i32_0 : i32, i32
  }
  func.func @transform_4(%arg0: i32, %arg1: i32) -> (i32, i32) {
    %c0_i32 = arith.constant 0 : i32
    %c0_i32_0 = arith.constant 0 : i32
    %c0_i32_1 = arith.constant 0 : i32
    return %c0_i32, %c0_i32_0 : i32, i32
  }
  func.func @transform_5(%arg0: i32, %arg1: i32) -> (i32, i32) {
    %c0_i32 = arith.constant 0 : i32
    %c0_i32_0 = arith.constant 0 : i32
    %c0_i32_1 = arith.constant 0 : i32
    return %c0_i32, %c0_i32_0 : i32, i32
  }
  func.func @transform_6(%arg0: i32, %arg1: i32) -> (i32, i32) {
    %c0_i32 = arith.constant 0 : i32
    %c0_i32_0 = arith.constant 0 : i32
    %c0_i32_1 = arith.constant 0 : i32
    return %c0_i32, %c0_i32_0 : i32, i32
  }
  func.func @transform_7(%arg0: i32, %arg1: i32) -> (i32, i32, i32) {
    %c0_i32 = arith.constant 0 : i32
    %c0_i32_0 = arith.constant 0 : i32
    %c0_i32_1 = arith.constant 0 : i32
    return %arg0, %c0_i32, %c0_i32_0 : i32, i32, i32
  }
}

</mosaic_0001>

<llo_original>
// kernel: tpu_custom_call.1
$region0: #{tpu_custom_call.1}
  #allocation0 [shape = 'u32[]', space=smem, size = 0x4, offset = 0x4, fixed_abs, tag = 'smem constant byte address 0x4 - core index']
  #allocation1 [shape = 'u32[144,128]{1,0:T(1,128)}', space=vmem, size = 0x12000, scoped, tag = 'internal scratch']
  #allocation2 [shape = 'f32[1,64]{1,0:T(1,128)}', space=vmem, size = 0x200, scoped, tag = 'scratch operand']
  %s0 = inlined_call_operand.vmem [shape: f32[2,256,64], index: 0, kind: input, shape index: {}]
  %s1 = inlined_call_operand.vmem [shape: f32[64,16], index: 1, kind: input, shape index: {}]
  %s2 = inlined_call_operand.vmem [shape: f32[1,16], index: 2, kind: input, shape index: {}]
  %s3 = inlined_call_operand.vmem [shape: f32[1,16], index: 3, kind: input, shape index: {}]
  %s4 = inlined_call_operand.vmem [shape: f32[16,64], index: 4, kind: input, shape index: {}]
  %s5 = inlined_call_operand.vmem [shape: f32[1,64], index: 5, kind: input, shape index: {}]
  %s6 = inlined_call_operand.vmem [shape: f32[1,64], index: 6, kind: input, shape index: {}]
  %s7 = inlined_call_operand.hbm [shape: f32[2,1,64], index: 7, kind: output, shape index: {}]
  %s8 = sld [smem:[#allocation0]]
  $region69: #{tpu_custom_call.1} parent=0
    _
  %s10 = ssub.s32 1, %s8
  %s11 = scalar_select 0, %s10, %s8
  $region1: #{tpu_custom_call.1} parent=0
    #allocation3 [shape = 'u8[1024]{0}', space=vmem, size = 0x400, scoped, tag = 'output window, operand 0']
    #allocation4 [shape = 's32[2]{0}', space=sflag, size = 0x8, scoped, tag = 'scoped memory for tpu_custom_call.1']
    %12 = vsyncpa [#allocation4], 0
    %s13 = scalar_lea.sflag [#allocation4], 1
    %14 = vsyncpa %s13, 0
    loop: start=0, step=1, limit=4
    $region2: #{tpu_custom_call.1} parent=1 // loop_pre_header
      _
    $region3: #{tpu_custom_call.1} parent=1 // loop_header
      %s16 = sphi 0, %s20
      %p17 = scmp.ge.s32.totalorder %s16, 4
      %s23 = sphi 0, %s35
      %s24 = sphi 0, %s31
      %s25 = sphi 0, %s23
      %s26 = sphi 0, %s24
      %s27 = sphi 0, %s25
      %s28 = sphi 0, %s26
      %s40 = sphi 0, %s42
      %s43 = sphi 0, %s40
      %s44 = sphi 0, %s43
      %s60 = sphi 0, %s44
      %s64 = sphi 0, %s64
      %s66 = sphi 0, %s64
      %s67 = sphi 0, %s66
      %s81 = sphi 0, %s67
      %s85 = sphi 0, %s85
      %s87 = sphi 0, %s85
      %s88 = sphi 0, %s87
      %s102 = sphi 0, %s88
      %s106 = sphi 0, %s106
      %s108 = sphi 0, %s106
      %s109 = sphi 0, %s108
      %s123 = sphi 0, %s109
      %s127 = sphi 0, %s127
      %s129 = sphi 0, %s127
      %s130 = sphi 0, %s129
      %s144 = sphi 0, %s130
      %s148 = sphi 0, %s148
      %s150 = sphi 0, %s148
      %s151 = sphi 0, %s150
      %s165 = sphi 0, %s151
      %s169 = sphi 0, %s169
      %s171 = sphi 0, %s169
      %s172 = sphi 0, %s171
      %s186 = sphi 0, %s172
      %s192 = sphi 0, %s194
      %s195 = sphi 0, %s192
      %s196 = sphi 0, %s195
      %s212 = sphi 0, %s196
    $region4: #{tpu_custom_call.1} parent=1 // loop_header_branch
      %19 = sbr.rel (%p17) target = $region8
    $region5: #{tpu_custom_call.1} parent=1 // loop_body
      %s21 = ssub.s32 %s16, 1
      %s22 = ssub.s32 %s16, 2
      %s29 = sadd.s32 1, %s24
      %p30 = scmp.ge.s32.totalorder %s29, 1
      %s31 = scalar_select %p30, 0, %s29
      %s32 = sadd.s32 1, %s23
      %s33 = scalar_select %p30, %s32, %s23
      %p34 = scmp.ge.s32.totalorder %s33, 2
      %s35 = scalar_select %p34, 0, %s33
      %s36 = ssub.s32 %s23, %s35
      %s37 = ssub.s32 %s24, %s31
      %s38 = sor.u32 %s36, %s37
      %p39 = scmp.eq.s32.totalorder %s38, 0
      %s41 = sadd.s32 %s40, 1
      %s42 = scalar_select %p39, %s40, %s41
      %p45 = pneg %p39
      %p46 = scmp.eq.s32.totalorder %s16, 1
      %p47 = por %p45, %p46
      %p48 = scmp.ne.s32.totalorder %s40, %s43
      %p49 = scmp.eq.s32.totalorder %s16, 0
      %p50 = por %p48, %p49
      %p51 = scmp.ne.s32.totalorder %s40, %s43
      %p52 = scmp.eq.s32.totalorder %s21, 1
      %p53 = por %p51, %p52
      %p54 = scmp.ne.s32.totalorder %s43, %s44
      %p55 = scmp.eq.s32.totalorder %s21, 0
      %p56 = por %p54, %p55
      %p57 = scmp.ne.s32.totalorder %s43, %s44
      %p58 = scmp.eq.s32.totalorder %s22, 1
      %p59 = por %p57, %p58
      %p61 = scmp.ne.s32.totalorder %s44, %s60
      %p62 = scmp.eq.s32.totalorder %s22, 0
      %p63 = por %p61, %p62
      %s65 = sadd.s32 %s64, 1
      %p68 = scmp.eq.s32.totalorder %s16, 1
      %p69 = scmp.ne.s32.totalorder %s64, %s66
      %p70 = scmp.eq.s32.totalorder %s16, 0
      %p71 = por %p69, %p70
      %p72 = scmp.ne.s32.totalorder %s64, %s66
      %p73 = scmp.eq.s32.totalorder %s21, 1
      %p74 = por %p72, %p73
      %p75 = scmp.ne.s32.totalorder %s66, %s67
      %p76 = scmp.eq.s32.totalorder %s21, 0
      %p77 = por %p75, %p76
      %p78 = scmp.ne.s32.totalorder %s66, %s67
      %p79 = scmp.eq.s32.totalorder %s22, 1
      %p80 = por %p78, %p79
      %p82 = scmp.ne.s32.totalorder %s67, %s81
      %p83 = scmp.eq.s32.totalorder %s22, 0
      %p84 = por %p82, %p83
      %s86 = sadd.s32 %s85, 1
      %p89 = scmp.eq.s32.totalorder %s16, 1
      %p90 = scmp.ne.s32.totalorder %s85, %s87
      %p91 = scmp.eq.s32.totalorder %s16, 0
      %p92 = por %p90, %p91
      %p93 = scmp.ne.s32.totalorder %s85, %s87
      %p94 = scmp.eq.s32.totalorder %s21, 1
      %p95 = por %p93, %p94
      %p96 = scmp.ne.s32.totalorder %s87, %s88
      %p97 = scmp.eq.s32.totalorder %s21, 0
      %p98 = por %p96, %p97
      %p99 = scmp.ne.s32.totalorder %s87, %s88
      %p100 = scmp.eq.s32.totalorder %s22, 1
      %p101 = por %p99, %p100
      %p103 = scmp.ne.s32.totalorder %s88, %s102
      %p104 = scmp.eq.s32.totalorder %s22, 0
      %p105 = por %p103, %p104
      %s107 = sadd.s32 %s106, 1
      %p110 = scmp.eq.s32.totalorder %s16, 1
      %p111 = scmp.ne.s32.totalorder %s106, %s108
      %p112 = scmp.eq.s32.totalorder %s16, 0
      %p113 = por %p111, %p112
      %p114 = scmp.ne.s32.totalorder %s106, %s108
      %p115 = scmp.eq.s32.totalorder %s21, 1
      %p116 = por %p114, %p115
      %p117 = scmp.ne.s32.totalorder %s108, %s109
      %p118 = scmp.eq.s32.totalorder %s21, 0
      %p119 = por %p117, %p118
      %p120 = scmp.ne.s32.totalorder %s108, %s109
      %p121 = scmp.eq.s32.totalorder %s22, 1
      %p122 = por %p120, %p121
      %p124 = scmp.ne.s32.totalorder %s109, %s123
      %p125 = scmp.eq.s32.totalorder %s22, 0
      %p126 = por %p124, %p125
      %s128 = sadd.s32 %s127, 1
      %p131 = scmp.eq.s32.totalorder %s16, 1
      %p132 = scmp.ne.s32.totalorder %s127, %s129
      %p133 = scmp.eq.s32.totalorder %s16, 0
      %p134 = por %p132, %p133
      %p135 = scmp.ne.s32.totalorder %s127, %s129
      %p136 = scmp.eq.s32.totalorder %s21, 1
      %p137 = por %p135, %p136
      %p138 = scmp.ne.s32.totalorder %s129, %s130
      %p139 = scmp.eq.s32.totalorder %s21, 0
      %p140 = por %p138, %p139
      %p141 = scmp.ne.s32.totalorder %s129, %s130
      %p142 = scmp.eq.s32.totalorder %s22, 1
      %p143 = por %p141, %p142
      %p145 = scmp.ne.s32.totalorder %s130, %s144
      %p146 = scmp.eq.s32.totalorder %s22, 0
      %p147 = por %p145, %p146
      %s149 = sadd.s32 %s148, 1
      %p152 = scmp.eq.s32.totalorder %s16, 1
      %p153 = scmp.ne.s32.totalorder %s148, %s150
      %p154 = scmp.eq.s32.totalorder %s16, 0
      %p155 = por %p153, %p154
      %p156 = scmp.ne.s32.totalorder %s148, %s150
      %p157 = scmp.eq.s32.totalorder %s21, 1
      %p158 = por %p156, %p157
      %p159 = scmp.ne.s32.totalorder %s150, %s151
      %p160 = scmp.eq.s32.totalorder %s21, 0
      %p161 = por %p159, %p160
      %p162 = scmp.ne.s32.totalorder %s150, %s151
      %p163 = scmp.eq.s32.totalorder %s22, 1
      %p164 = por %p162, %p163
      %p166 = scmp.ne.s32.totalorder %s151, %s165
      %p167 = scmp.eq.s32.totalorder %s22, 0
      %p168 = por %p166, %p167
      %s170 = sadd.s32 %s169, 1
      %p173 = scmp.eq.s32.totalorder %s16, 1
      %p174 = scmp.ne.s32.totalorder %s169, %s171
      %p175 = scmp.eq.s32.totalorder %s16, 0
      %p176 = por %p174, %p175
      %p177 = scmp.ne.s32.totalorder %s169, %s171
      %p178 = scmp.eq.s32.totalorder %s21, 1
      %p179 = por %p177, %p178
      %p180 = scmp.ne.s32.totalorder %s171, %s172
      %p181 = scmp.eq.s32.totalorder %s21, 0
      %p182 = por %p180, %p181
      %p183 = scmp.ne.s32.totalorder %s171, %s172
      %p184 = scmp.eq.s32.totalorder %s22, 1
      %p185 = por %p183, %p184
      %p187 = scmp.ne.s32.totalorder %s172, %s186
      %p188 = scmp.eq.s32.totalorder %s22, 0
      %p189 = por %p187, %p188
      %s190 = ssub.s32 %s23, %s35
      %p191 = scmp.eq.s32.totalorder %s190, 0
      %s193 = sadd.s32 %s192, 1
      %s194 = scalar_select %p191, %s192, %s193
      %p197 = pneg %p191
      %p198 = scmp.eq.s32.totalorder %s16, 1
      %p199 = por %p197, %p198
      %p200 = scmp.ne.s32.totalorder %s192, %s195
      %p201 = scmp.eq.s32.totalorder %s16, 0
      %p202 = por %p200, %p201
      %p203 = scmp.ne.s32.totalorder %s192, %s195
      %p204 = scmp.eq.s32.totalorder %s21, 1
      %p205 = por %p203, %p204
      %p206 = scmp.ne.s32.totalorder %s195, %s196
      %p207 = scmp.eq.s32.totalorder %s21, 0
      %p208 = por %p206, %p207
      %p209 = scmp.ne.s32.totalorder %s195, %s196
      %p210 = scmp.eq.s32.totalorder %s22, 1
      %p211 = por %p209, %p210
      %p213 = scmp.ne.s32.totalorder %s196, %s212
      %p214 = scmp.eq.s32.totalorder %s22, 0
      %p215 = por %p213, %p214
      %p216 = scmp.le.s32.totalorder 1, %s16
      %p217 = scmp.lt.s32.totalorder %s16, 3
      %p218 = pnand %p216, %p217
      %p219 = pneg %p218
      // Predicated region
      $region9: #{tpu_custom_call.1} parent=5 // pred_check
        _
      $region10: #{tpu_custom_call.1} parent=5 // pred_check_branch
        %221 = sbr.rel (%p218) target = $region12
      $region11: #{tpu_custom_call.1} parent=5 // pred_region
        %s222 = ssub.s32 %s16, 1
        // Predicated region
        $region13: #{tpu_custom_call.1} parent=11 // pred_check
          %p223 = pneg %p77
        $region14: #{tpu_custom_call.1} parent=11 // pred_check_branch
          %225 = sbr.rel (%p223) target = $region16
        $region15: #{tpu_custom_call.1} parent=11 // pred_region
          _
        $region16: #{tpu_custom_call.1} parent=11 // pred_fallthru
          _
        // Predicated region
        $region17: #{tpu_custom_call.1} parent=11 // pred_check
          %p226 = pneg %p98
        $region18: #{tpu_custom_call.1} parent=11 // pred_check_branch
          %228 = sbr.rel (%p226) target = $region20
        $region19: #{tpu_custom_call.1} parent=11 // pred_region
          _
        $region20: #{tpu_custom_call.1} parent=11 // pred_fallthru
          _
        // Predicated region
        $region21: #{tpu_custom_call.1} parent=11 // pred_check
          %p229 = pneg %p119
        $region22: #{tpu_custom_call.1} parent=11 // pred_check_branch
          %231 = sbr.rel (%p229) target = $region24
        $region23: #{tpu_custom_call.1} parent=11 // pred_region
          _
        $region24: #{tpu_custom_call.1} parent=11 // pred_fallthru
          _
        // Predicated region
        $region25: #{tpu_custom_call.1} parent=11 // pred_check
          %p232 = pneg %p140
        $region26: #{tpu_custom_call.1} parent=11 // pred_check_branch
          %234 = sbr.rel (%p232) target = $region28
        $region27: #{tpu_custom_call.1} parent=11 // pred_region
          _
        $region28: #{tpu_custom_call.1} parent=11 // pred_fallthru
          _
        // Predicated region
        $region29: #{tpu_custom_call.1} parent=11 // pred_check
          %p235 = pneg %p161
        $region30: #{tpu_custom_call.1} parent=11 // pred_check_branch
          %237 = sbr.rel (%p235) target = $region32
        $region31: #{tpu_custom_call.1} parent=11 // pred_region
          _
        $region32: #{tpu_custom_call.1} parent=11 // pred_fallthru
          _
        // Predicated region
        $region33: #{tpu_custom_call.1} parent=11 // pred_check
          %p238 = pneg %p182
        $region34: #{tpu_custom_call.1} parent=11 // pred_check_branch
          %240 = sbr.rel (%p238) target = $region36
        $region35: #{tpu_custom_call.1} parent=11 // pred_region
          _
        $region36: #{tpu_custom_call.1} parent=11 // pred_fallthru
          _
      $region12: #{tpu_custom_call.1} parent=5 // pred_fallthru
        _
      %p241 = scmp.lt.s32.totalorder %s16, 2
      // Predicated region
      $region37: #{tpu_custom_call.1} parent=5 // pred_check
        %p242 = pneg %p241
      $region38: #{tpu_custom_call.1} parent=5 // pred_check_branch
        %244 = sbr.rel (%p242) target = $region40
      $region39: #{tpu_custom_call.1} parent=5 // pred_region
        // Predicated region
        $region41: #{tpu_custom_call.1} parent=39 // pred_check
          %p245 = pneg %p50
        $region42: #{tpu_custom_call.1} parent=39 // pred_check_branch
          %247 = sbr.rel (%p245) target = $region44
        $region43: #{tpu_custom_call.1} parent=39 // pred_region
          %s248 = smul.u32 32, %s24
          %p249 = scmp.lt.s32.totalorder %s23, 1
          %s250 = scalar_select %p249, %s23, 1
          %p251 = scmp.lt.s32.totalorder %s248, 31
          %s252 = scalar_select %p251, %s248, 31
          %s253 = smul.addr %s250, 32
          %s254 = sadd.s32 %s252, %s253
          %s255 = smul.addr %s254, 8
          %s256 = scalar_lea.vmem %s0, %s255
          %s257 = smul.u32 32, %s24
        $region44: #{tpu_custom_call.1} parent=39 // pred_fallthru
          _
      $region40: #{tpu_custom_call.1} parent=5 // pred_fallthru
        _
      %p258 = scmp.le.s32.totalorder 1, %s16
      %p259 = scmp.lt.s32.totalorder %s16, 3
      %p260 = pnand %p258, %p259
      %p261 = pneg %p260
      // Predicated region
      $region45: #{tpu_custom_call.1} parent=5 // pred_check
        _
      $region46: #{tpu_custom_call.1} parent=5 // pred_check_branch
        %263 = sbr.rel (%p260) target = $region48
      $region47: #{tpu_custom_call.1} parent=5 // pred_region
        %s264 = ssub.s32 %s16, 1
        %s265 = smul.u32 32, %s26
        %p266 = scmp.lt.s32.totalorder %s25, 1
        %s267 = scalar_select %p266, %s25, 1
        %p268 = scmp.lt.s32.totalorder %s265, 31
        %s269 = scalar_select %p268, %s265, 31
        %s270 = smul.addr %s267, 32
        %s271 = sadd.s32 %s269, %s270
        %s272 = smul.addr %s271, 8
        %s273 = scalar_lea.vmem %s0, %s272
        %p274 = pneg %p56
        %p275 = pneg %p53
        %p276 = pneg %p77
        %p277 = pneg %p74
        %p278 = pneg %p98
        %p279 = pneg %p95
        %p280 = pneg %p119
        %p281 = pneg %p116
        %p282 = pneg %p140
        %p283 = pneg %p137
        %p284 = pneg %p161
        %p285 = pneg %p158
        %p286 = pneg %p182
        %p287 = pneg %p179
        %p288 = pneg %p208
        %p289 = pneg %p205
        %s290 = sand.u32 %s195, 1
        %s291 = scalar_lea.sflag [#allocation4], %s290
        %s292 = sand.u32 %s195, 1
        %s293 = scalar_lea.vmem [#allocation3], %s292
        %s294 = smul.u32 32, %s26
        %p295 = scmp.lt.s32.totalorder %s25, 1
        %s296 = scalar_select %p295, %s25, 1
        %p297 = scmp.lt.s32.totalorder %s294, 31
        %s298 = scalar_select %p297, %s294, 31
        %s299 = smul.addr %s296, 32
        %s300 = sadd.s32 %s298, %s299
        %s301 = smul.addr %s300, 8
        %s302 = scalar_lea.vmem %s0, %s301
        %s303 = smul.u32 32, %s26
        %p304 = scmp.eq.s32.totalorder %s26, 0
        // Predicated region
        $region49: #{tpu_custom_call.1} parent=47 // pred_check
          %p305 = pneg %p304
        $region50: #{tpu_custom_call.1} parent=47 // pred_check_branch
          %307 = sbr.rel (%p305) target = $region52
        $region51: #{tpu_custom_call.1} parent=47 // pred_region
          %vm308 = vcmask 516096
          %309 = vst.msk [vmem:[#allocation2] sm:$0x1] %vm308, 0.0
        $region52: #{tpu_custom_call.1} parent=47 // pred_fallthru
          _
        %v310 = vld [vmem:[#allocation2] sm:$0x1]
        %v311 = vld [vmem:[%s302] sm:$0xff]
        %v312 = vld [vmem:[%s302 + $0x8] sm:$0xff]
        %v313 = vld [vmem:[%s302 + $0x10] sm:$0xff]
        %v314 = vld [vmem:[%s302 + $0x18] sm:$0xff]
        %v315 = vld [vmem:[%s302 + $0x20] sm:$0xff]
        %v316 = vld [vmem:[%s302 + $0x28] sm:$0xff]
        %v317 = vld [vmem:[%s302 + $0x30] sm:$0xff]
        %v318 = vld [vmem:[%s302 + $0x38] sm:$0xff]
        %v319 = vld [vmem:[%s302 + $0x40] sm:$0xff]
        %v320 = vld [vmem:[%s302 + $0x48] sm:$0xff]
        %v321 = vld [vmem:[%s302 + $0x50] sm:$0xff]
        %v322 = vld [vmem:[%s302 + $0x58] sm:$0xff]
        %v323 = vld [vmem:[%s302 + $0x60] sm:$0xff]
        %v324 = vld [vmem:[%s302 + $0x68] sm:$0xff]
        %v325 = vld [vmem:[%s302 + $0x70] sm:$0xff]
        %v326 = vld [vmem:[%s302 + $0x78] sm:$0xff]
        %v327 = vld [vmem:[%s302 + $0x80] sm:$0xff]
        %v328 = vld [vmem:[%s302 + $0x88] sm:$0xff]
        %v329 = vld [vmem:[%s302 + $0x90] sm:$0xff]
        %v330 = vld [vmem:[%s302 + $0x98] sm:$0xff]
        %v331 = vld [vmem:[%s302 + $0xa0] sm:$0xff]
        %v332 = vld [vmem:[%s302 + $0xa8] sm:$0xff]
        %v333 = vld [vmem:[%s302 + $0xb0] sm:$0xff]
        %v334 = vld [vmem:[%s302 + $0xb8] sm:$0xff]
        %v335 = vld [vmem:[%s302 + $0xc0] sm:$0xff]
        %v336 = vld [vmem:[%s302 + $0xc8] sm:$0xff]
        %v337 = vld [vmem:[%s302 + $0xd0] sm:$0xff]
        %v338 = vld [vmem:[%s302 + $0xd8] sm:$0xff]
        %v339 = vld [vmem:[%s302 + $0xe0] sm:$0xff]
        %v340 = vld [vmem:[%s302 + $0xe8] sm:$0xff]
        %v341 = vld [vmem:[%s302 + $0xf0] sm:$0xff]
        %v342 = vld [vmem:[%s302 + $0xf8] sm:$0xff]
        %vm343 = vcmask 523264
        %v344 = vsel %vm343, %v311, 0.0
        %v345 = vsel %vm343, %v312, 0.0
        %v346 = vadd.f32 %v344, %v345
        %v347 = vsel %vm343, %v313, 0.0
        %v348 = vadd.f32 %v346, %v347
        %v349 = vsel %vm343, %v314, 0.0
        %v350 = vadd.f32 %v348, %v349
        %v351 = vsel %vm343, %v315, 0.0
        %v352 = vadd.f32 %v350, %v351
        %v353 = vsel %vm343, %v316, 0.0
        %v354 = vadd.f32 %v352, %v353
        %v355 = vsel %vm343, %v317, 0.0
        %v356 = vadd.f32 %v354, %v355
        %v357 = vsel %vm343, %v318, 0.0
        %v358 = vadd.f32 %v356, %v357
        %v359 = vsel %vm343, %v319, 0.0
        %v360 = vadd.f32 %v358, %v359
        %v361 = vsel %vm343, %v320, 0.0
        %v362 = vadd.f32 %v360, %v361
        %v363 = vsel %vm343, %v321, 0.0
        %v364 = vadd.f32 %v362, %v363
        %v365 = vsel %vm343, %v322, 0.0
        %v366 = vadd.f32 %v364, %v365
        %v367 = vsel %vm343, %v323, 0.0
        %v368 = vadd.f32 %v366, %v367
        %v369 = vsel %vm343, %v324, 0.0
        %v370 = vadd.f32 %v368, %v369
        %v371 = vsel %vm343, %v325, 0.0
        %v372 = vadd.f32 %v370, %v371
        %v373 = vsel %vm343, %v326, 0.0
        %v374 = vadd.f32 %v372, %v373
        %v375 = vsel %vm343, %v327, 0.0
        %v376 = vadd.f32 %v374, %v375
        %v377 = vsel %vm343, %v328, 0.0
        %v378 = vadd.f32 %v376, %v377
        %v379 = vsel %vm343, %v329, 0.0
        %v380 = vadd.f32 %v378, %v379
        %v381 = vsel %vm343, %v330, 0.0
        %v382 = vadd.f32 %v380, %v381
        %v383 = vsel %vm343, %v331, 0.0
        %v384 = vadd.f32 %v382, %v383
        %v385 = vsel %vm343, %v332, 0.0
        %v386 = vadd.f32 %v384, %v385
        %v387 = vsel %vm343, %v333, 0.0
        %v388 = vadd.f32 %v386, %v387
        %v389 = vsel %vm343, %v334, 0.0
        %v390 = vadd.f32 %v388, %v389
        %v391 = vsel %vm343, %v335, 0.0
        %v392 = vadd.f32 %v390, %v391
        %v393 = vsel %vm343, %v336, 0.0
        %v394 = vadd.f32 %v392, %v393
        %v395 = vsel %vm343, %v337, 0.0
        %v396 = vadd.f32 %v394, %v395
        %v397 = vsel %vm343, %v338, 0.0
        %v398 = vadd.f32 %v396, %v397
        %v399 = vsel %vm343, %v339, 0.0
        %v400 = vadd.f32 %v398, %v399
        %v401 = vsel %vm343, %v340, 0.0
        %v402 = vadd.f32 %v400, %v401
        %v403 = vsel %vm343, %v341, 0.0
        %v404 = vadd.f32 %v402, %v403
        %v405 = vsel %vm343, %v342, 0.0
        %v406 = vadd.f32 %v404, %v405
        %v407 = vrot.slane %v406, 4
        %v408 = vadd.f32 %v406, %v407
        %v409 = vrot.slane %v408, 2
        %v410 = vadd.f32 %v408, %v409
        %v411 = vrot.slane %v410, 1
        %v412 = vadd.f32 %v410, %v411
        %v413 = vadd.f32 %v310, %v412
        %vm414 = vcmask 516096
        %415 = vst.msk [vmem:[#allocation2] sm:$0x1] %vm414, %v413
        // Predicated region
        $region53: #{tpu_custom_call.1} parent=47 // pred_check
          %p416 = pneg %p304
        $region54: #{tpu_custom_call.1} parent=47 // pred_check_branch
          %418 = sbr.rel (%p416) target = $region56
        $region55: #{tpu_custom_call.1} parent=47 // pred_region
          %v419 = vld [vmem:[#allocation2] sm:$0x1]
          %v420 = vmul.f32 %v419, 0.00390625
          %v421 = vld [vmem:[%s1] sm:$0xff]
          %v422 = vld [vmem:[%s1 + $0x8] sm:$0xff]
          %v423 = vld [vmem:[%s1 + $0x10] sm:$0xff]
          %v424 = vld [vmem:[%s1 + $0x18] sm:$0xff]
          %v425 = vld [vmem:[%s1 + $0x20] sm:$0xff]
          %v426 = vld [vmem:[%s1 + $0x28] sm:$0xff]
          %v427 = vld [vmem:[%s1 + $0x30] sm:$0xff]
          %v428 = vld [vmem:[%s1 + $0x38] sm:$0xff]
          %v430 = vsel %vm343, %v420, 0
          %432 = vmatprep.subr.mxu0 0.0
          %433 = vmatpush1.msra.mxu0 0.0
          %434 = vmatprep.subr.mxu0 0.0
          %435 = vmatpush1.msra.mxu0 0.0
          %436 = vmatprep.subr.mxu0 0.0
          %437 = vmatpush1.msra.mxu0 0.0
          %438 = vmatprep.subr.mxu0 0.0
          %439 = vmatpush1.msra.mxu0 0.0
          %440 = vmatprep.subr.mxu0 0.0
          %441 = vmatpush1.msra.mxu0 0.0
          %442 = vmatprep.subr.mxu0 0.0
          %443 = vmatpush1.msra.mxu0 0.0
          %444 = vmatprep.subr.mxu0 0.0
          %445 = vmatpush1.msra.mxu0 0.0
          %446 = vmatprep.subr.mxu0 0.0
          %447 = vmatpush1.msra.mxu0 0.0
          %448 = vmatprep.subr.mxu0 0.0
          %449 = vmatpush1.msra.mxu0 %v428
          %450 = vmatprep.subr.mxu0 0.0
          %451 = vmatpush1.msra.mxu0 %v427
          %452 = vmatprep.subr.mxu0 0.0
          %453 = vmatpush1.msra.mxu0 %v426
          %454 = vmatprep.subr.mxu0 0.0
          %455 = vmatpush1.msra.mxu0 %v425
          %456 = vmatprep.subr.mxu0 0.0
          %457 = vmatpush1.msra.mxu0 %v424
          %458 = vmatprep.subr.mxu0 0.0
          %459 = vmatpush1.msra.mxu0 %v423
          %460 = vmatprep.subr.mxu0 0.0
          %461 = vmatpush1.msra.mxu0 %v422
          %462 = vmatprep.subr.mxu0 0.0
          %463 = vmatpush1.msra.mxu0 %v421
          %464 = vmatprep.subr.mxu0 0.0
          %465 = vmatpush2.msra.mxu0 0.0
          %466 = vmatprep.subr.mxu0 0.0
          %467 = vmatpush2.msra.mxu0 0.0
          %468 = vmatprep.subr.mxu0 0.0
          %469 = vmatpush2.msra.mxu0 0.0
          %470 = vmatprep.subr.mxu0 0.0
          %471 = vmatpush2.msra.mxu0 0.0
          %472 = vmatprep.subr.mxu0 0.0
          %473 = vmatpush2.msra.mxu0 0.0
          %474 = vmatprep.subr.mxu0 0.0
          %475 = vmatpush2.msra.mxu0 0.0
          %476 = vmatprep.subr.mxu0 0.0
          %477 = vmatpush2.msra.mxu0 0.0
          %478 = vmatprep.subr.mxu0 0.0
          %479 = vmatpush2.msra.mxu0 0.0
          %480 = vmatprep.subr.mxu0 0.0
          %481 = vmatpush2.msra.mxu0 0.0
          %482 = vmatprep.subr.mxu0 0.0
          %483 = vmatpush2.msra.mxu0 0.0
          %484 = vmatprep.subr.mxu0 0.0
          %485 = vmatpush2.msra.mxu0 0.0
          %486 = vmatprep.subr.mxu0 0.0
          %487 = vmatpush2.msra.mxu0 0.0
          %488 = vmatprep.subr.mxu0 0.0
          %489 = vmatpush2.msra.mxu0 0.0
          %490 = vmatprep.subr.mxu0 0.0
          %491 = vmatpush2.msra.mxu0 0.0
          %492 = vmatprep.subr.mxu0 0.0
          %493 = vmatpush2.msra.mxu0 0.0
          %494 = vmatprep.subr.mxu0 0.0
          %495 = vmatpush2.msra.mxu0 0.0
          %496 = vmatprep.mubr.f32.mxu0 0.0
          %497 = vmatmul.mubr.f32.gmra.mxu0 %v430
          %v498 = vpop.f32.mrf.mxu0
          %v499 = vadd.f32 0.0, %v498
          %v500 = vpop.f32.mrf.mxu0
          %501 = vdwg.mxu0
          %v502 = vld [vmem:[%s2] sm:$0x1]
          %v503 = vmul.f32 %v499, %v502
          %v504 = vld [vmem:[%s3] sm:$0x1]
          %v505 = vadd.f32 %v503, %v504
          %v506 = vmax.f32 %v505, 0.0
          %v507 = vld [vmem:[%s4] sm:$0xff]
          %v508 = vld [vmem:[%s4 + $0x8] sm:$0xff]
          %vm509 = vcmask 130048
          %v511 = vsel %vm509, %v506, 0
          %513 = vmatprep.subr.mxu0 0.0
          %514 = vmatpush1.msra.mxu0 0.0
          %515 = vmatprep.subr.mxu0 0.0
          %516 = vmatpush1.msra.mxu0 0.0
          %517 = vmatprep.subr.mxu0 0.0
          %518 = vmatpush1.msra.mxu0 0.0
          %519 = vmatprep.subr.mxu0 0.0
          %520 = vmatpush1.msra.mxu0 0.0
          %521 = vmatprep.subr.mxu0 0.0
          %522 = vmatpush1.msra.mxu0 0.0
          %523 = vmatprep.subr.mxu0 0.0
          %524 = vmatpush1.msra.mxu0 0.0
          %525 = vmatprep.subr.mxu0 0.0
          %526 = vmatpush1.msra.mxu0 0.0
          %527 = vmatprep.subr.mxu0 0.0
          %528 = vmatpush1.msra.mxu0 0.0
          %529 = vmatprep.subr.mxu0 0.0
          %530 = vmatpush1.msra.mxu0 0.0
          %531 = vmatprep.subr.mxu0 0.0
          %532 = vmatpush1.msra.mxu0 0.0
          %533 = vmatprep.subr.mxu0 0.0
          %534 = vmatpush1.msra.mxu0 0.0
          %535 = vmatprep.subr.mxu0 0.0
          %536 = vmatpush1.msra.mxu0 0.0
          %537 = vmatprep.subr.mxu0 0.0
          %538 = vmatpush1.msra.mxu0 0.0
          %539 = vmatprep.subr.mxu0 0.0
          %540 = vmatpush1.msra.mxu0 0.0
          %541 = vmatprep.subr.mxu0 0.0
          %542 = vmatpush1.msra.mxu0 %v508
          %543 = vmatprep.subr.mxu0 0.0
          %544 = vmatpush1.msra.mxu0 %v507
          %545 = vmatprep.subr.mxu0 0.0
          %546 = vmatpush2.msra.mxu0 0.0
          %547 = vmatprep.subr.mxu0 0.0
          %548 = vmatpush2.msra.mxu0 0.0
          %549 = vmatprep.subr.mxu0 0.0
          %550 = vmatpush2.msra.mxu0 0.0
          %551 = vmatprep.subr.mxu0 0.0
          %552 = vmatpush2.msra.mxu0 0.0
          %553 = vmatprep.subr.mxu0 0.0
          %554 = vmatpush2.msra.mxu0 0.0
          %555 = vmatprep.subr.mxu0 0.0
          %556 = vmatpush2.msra.mxu0 0.0
          %557 = vmatprep.subr.mxu0 0.0
          %558 = vmatpush2.msra.mxu0 0.0
          %559 = vmatprep.subr.mxu0 0.0
          %560 = vmatpush2.msra.mxu0 0.0
          %561 = vmatprep.subr.mxu0 0.0
          %562 = vmatpush2.msra.mxu0 0.0
          %563 = vmatprep.subr.mxu0 0.0
          %564 = vmatpush2.msra.mxu0 0.0
          %565 = vmatprep.subr.mxu0 0.0
          %566 = vmatpush2.msra.mxu0 0.0
          %567 = vmatprep.subr.mxu0 0.0
          %568 = vmatpush2.msra.mxu0 0.0
          %569 = vmatprep.subr.mxu0 0.0
          %570 = vmatpush2.msra.mxu0 0.0
          %571 = vmatprep.subr.mxu0 0.0
          %572 = vmatpush2.msra.mxu0 0.0
          %573 = vmatprep.subr.mxu0 0.0
          %574 = vmatpush2.msra.mxu0 0.0
          %575 = vmatprep.subr.mxu0 0.0
          %576 = vmatpush2.msra.mxu0 0.0
          %577 = vmatprep.mubr.f32.mxu0 0.0
          %578 = vmatmul.mubr.f32.gmra.mxu0 %v511
          %v579 = vpop.f32.mrf.mxu0
          %v580 = vadd.f32 0.0, %v579
          %v581 = vpop.f32.mrf.mxu0
          %582 = vdwg.mxu0
          %v583 = vld [vmem:[%s5] sm:$0x1]
          %v584 = vmul.f32 %v580, %v583
          %v585 = vld [vmem:[%s6] sm:$0x1]
          %v586 = vadd.f32 %v584, %v585
          %v587 = vmul.f32 %v586, 0.16666667
          %v588 = vadd.f32 %v587, 0.5
          %v589 = vmax.f32 %v588, 0.0
          %v590 = vmin.f32 %v589, 1.0
          %591 = vst.msk [vmem:[%s293] sm:$0x1] %vm414, %v590
        $region56: #{tpu_custom_call.1} parent=47 // pred_fallthru
          _
        %s592 = sand.u32 %s195, 1
        %s593 = scalar_lea.sflag [#allocation4], %s592
        %s594 = sand.u32 %s195, 1
        %s595 = scalar_lea.vmem [#allocation3], %s594
        // Predicated region
        $region57: #{tpu_custom_call.1} parent=47 // pred_check
          %p596 = pneg %p205
        $region58: #{tpu_custom_call.1} parent=47 // pred_check_branch
          %598 = sbr.rel (%p596) target = $region60
        $region59: #{tpu_custom_call.1} parent=47 // pred_region
          %s600 = ssub.s32 16, 16
          %601 = vsyncadd %s593, %s600
          %s602 = smul.addr %s25, 16
          %s603 = scalar_lea.hbm %s7, %s602
          %s605 = sshll.u32 %s595, 4
          %s606 = int_to_ptr.vmem [resolvable:$true] %s605
          %608 = dma.vmem_to_hbm [thread:$0]  %s606, 16, %s603, %s593
        $region60: #{tpu_custom_call.1} parent=47 // pred_fallthru
          _
      $region48: #{tpu_custom_call.1} parent=5 // pred_fallthru
        _
      %p609 = scmp.le.s32.totalorder 2, %s16
      // Predicated region
      $region61: #{tpu_custom_call.1} parent=5 // pred_check
        %p610 = pneg %p609
      $region62: #{tpu_custom_call.1} parent=5 // pred_check_branch
        %612 = sbr.rel (%p610) target = $region64
      $region63: #{tpu_custom_call.1} parent=5 // pred_region
        %s613 = ssub.s32 %s16, 2
        // Predicated region
        $region65: #{tpu_custom_call.1} parent=63 // pred_check
          %p614 = pneg %p211
        $region66: #{tpu_custom_call.1} parent=63 // pred_check_branch
          %616 = sbr.rel (%p614) target = $region68
        $region67: #{tpu_custom_call.1} parent=63 // pred_region
          %s617 = sand.u32 %s196, 1
          %s618 = scalar_lea.sflag [#allocation4], %s617
          %s619 = sand.u32 %s196, 1
          %s620 = scalar_lea.vmem [#allocation3], %s619
          %621 = dma.done %s618, 16
        $region68: #{tpu_custom_call.1} parent=63 // pred_fallthru
          _
      $region64: #{tpu_custom_call.1} parent=5 // pred_fallthru
        _
    $region6: #{tpu_custom_call.1} parent=1 // loop_footer
      %s20 = sadd.s32 1, %s16
    $region7: #{tpu_custom_call.1} parent=1 // loop_footer_branch
      %15 = sbr.rel target = $region3
    $region8: #{tpu_custom_call.1} parent=1 // loop_exit
      _
    %622 = vsyncpa [#allocation4], 1
    %s623 = scalar_lea.sflag [#allocation4], 1
    %624 = vsyncpa %s623, 1

</llo_original>
